<compile_context>
chip_gen: v7x
topology: tpu7x:2x2x1
jax: 0.10.0
libtpu: 0.0.40
codegen_flags: <defaults>
</compile_context>

<pallas_src>
import functools

import jax
import jax.numpy as jnp
from jax import lax
from jax.experimental import pallas as pl
from jax.experimental.pallas import tpu as pltpu

LN_EPS = 1e-5  # nn.LayerNorm default


def _round_up(x, m):
    return (x + m - 1) // m * m


def _layernorm_1pass(x, gamma, beta, inv_n):
    # Single data pass: var = E[x^2] - mu^2.  Padded lanes of x are exactly 0,
    # so both sums over the (padded) lane axis are unaffected; divide by the
    # TRUE feature count via the precomputed inv_n.  Padded gamma/beta are 0,
    # so padded output lanes are forced back to exactly 0.
    s1 = jnp.sum(x, axis=-1, keepdims=True)
    s2 = jnp.sum(x * x, axis=-1, keepdims=True)
    mu = s1 * inv_n
    var = s2 * inv_n - mu * mu
    return (x - mu) * lax.rsqrt(var + LN_EPS) * gamma + beta


def residual_block_kernel(x_ref, w1_ref, b1_ref, g1_ref, bt1_ref,
                          w2_ref, b2_ref, g2_ref, bt2_ref, o_ref,
                          *, inv_h, inv_f):
    x = x_ref[...]                                            # (TB, Fp) f32, kept for residual

    # fc1: bf16 MXU operands, f32 accumulation.
    h = jnp.dot(x.astype(jnp.bfloat16), w1_ref[...],
                preferred_element_type=jnp.float32) + b1_ref[...]
    h = _layernorm_1pass(h, g1_ref[...], bt1_ref[...], inv_h)
    h = jnp.maximum(h, 0.0)

    # fc2.  (For large H, stage `h` via a pltpu.VMEM scratch and K-tile w1/w2;
    # unnecessary at these sizes.)
    out = jnp.dot(h.astype(jnp.bfloat16), w2_ref[...],
                  preferred_element_type=jnp.float32) + b2_ref[...]
    out = _layernorm_1pass(out, g2_ref[...], bt2_ref[...], inv_f)

    out = out + x                                             # residual add in f32
    o_ref[...] = jnp.maximum(out, 0.0).astype(o_ref.dtype)


def residual_block(x, params):
    """x: (B, in_features) or (in_features,) float32."""
    if x.ndim == 1:                      # mirrors x.unsqueeze(0)
        x = x[None, :]
    x = x.astype(jnp.float32)
    B, F = x.shape
    H = params["w1"].shape[1]

    # Lane-dense padding (multiples of 128) and sublane-aligned batch tile.
    Fp = _round_up(F, 128)
    Hp = _round_up(H, 128)
    TB = 128 if B >= 128 else _round_up(B, 8)
    Bp = _round_up(B, TB)

    # Zero-pad everything; weights in bf16 for the MXU.
    xp = jnp.zeros((Bp, Fp), jnp.float32).at[:B, :F].set(x)
    w1 = jnp.zeros((Fp, Hp), jnp.bfloat16).at[:F, :H].set(
        params["w1"].astype(jnp.bfloat16))
    w2 = jnp.zeros((Hp, Fp), jnp.bfloat16).at[:H, :F].set(
        params["w2"].astype(jnp.bfloat16))
    b1 = jnp.zeros((1, Hp), jnp.float32).at[:, :H].set(params["b1"])
    g1 = jnp.zeros((1, Hp), jnp.float32).at[:, :H].set(params["g1"])
    bt1 = jnp.zeros((1, Hp), jnp.float32).at[:, :H].set(params["bt1"])
    b2 = jnp.zeros((1, Fp), jnp.float32).at[:, :F].set(params["b2"])
    g2 = jnp.zeros((1, Fp), jnp.float32).at[:, :F].set(params["g2"])
    bt2 = jnp.zeros((1, Fp), jnp.float32).at[:, :F].set(params["bt2"])

    kernel = functools.partial(residual_block_kernel,
                               inv_h=1.0 / H, inv_f=1.0 / F)

    # Params use a constant index_map -> DMA'd once, VMEM-resident across the
    # batch grid; x / out are pipelined over the batch axis.
    resident = lambda shape: pl.BlockSpec(shape, lambda i: (0,) * len(shape))

    out = pl.pallas_call(
        kernel,
        out_shape=jax.ShapeDtypeStruct((Bp, Fp), jnp.float32),
        grid=(Bp // TB,),
        in_specs=[
            pl.BlockSpec((TB, Fp), lambda i: (i, 0)),          # x (batch-tiled)
            resident((Fp, Hp)),                                 # w1
            resident((1, Hp)), resident((1, Hp)), resident((1, Hp)),  # b1, g1, bt1
            resident((Hp, Fp)),                                 # w2
            resident((1, Fp)), resident((1, Fp)), resident((1, Fp)),  # b2, g2, bt2
        ],
        out_specs=pl.BlockSpec((TB, Fp), lambda i: (i, 0)),
        compiler_params=pltpu.CompilerParams(
            dimension_semantics=("parallel",)),                 # split batch across TCs on v7x
    )(xp, w1, b1, g1, bt1, w2, b2, g2, bt2)

    return out[:B, :F]


def init_params(key, in_features, hidden_features):
    k1, k2, k3, k4 = jax.random.split(key, 4)
    # Deterministic, PyTorch-Linear-style uniform init (kaiming-uniform bounds).
    bound1 = 1.0 / jnp.sqrt(in_features)
    bound2 = 1.0 / jnp.sqrt(hidden_features)
    return {
        "w1": jax.random.uniform(k1, (in_features, hidden_features), jnp.float32,
                                 -bound1, bound1),
        "b1": jax.random.uniform(k2, (1, hidden_features), jnp.float32,
                                 -bound1, bound1),
        "g1": jnp.ones((1, hidden_features), jnp.float32),
        "bt1": jnp.zeros((1, hidden_features), jnp.float32),
        "w2": jax.random.uniform(k3, (hidden_features, in_features), jnp.float32,
                                 -bound2, bound2),
        "b2": jax.random.uniform(k4, (1, in_features), jnp.float32,
                                 -bound2, bound2),
        "g2": jnp.ones((1, in_features), jnp.float32),
        "bt2": jnp.zeros((1, in_features), jnp.float32),
    }


def _reference(x, p):
    # Pure-f32, PyTorch-faithful reference (centered variance).
    if x.ndim == 1:
        x = x[None, :]
    h = x @ p["w1"] + p["b1"]
    mu = h.mean(-1, keepdims=True)
    var = ((h - mu) ** 2).mean(-1, keepdims=True)
    h = (h - mu) / jnp.sqrt(var + LN_EPS) * p["g1"] + p["bt1"]
    h = jnp.maximum(h, 0.0)
    o = h @ p["w2"] + p["b2"]
    mu = o.mean(-1, keepdims=True)
    var = ((o - mu) ** 2).mean(-1, keepdims=True)
    o = (o - mu) / jnp.sqrt(var + LN_EPS) * p["g2"] + p["bt2"]
    return jnp.maximum(o + x, 0.0)


if __name__ == "__main__":
    key = jax.random.PRNGKey(0)
    kx, kp = jax.random.split(key)

    batch, in_features, hidden_features = 2, 32, 64
    x = jax.random.normal(kx, (batch, in_features), jnp.float32)
    params = init_params(kp, in_features, hidden_features)

    out = residual_block(x, params)
    out = jax.block_until_ready(out)

    ref = _reference(x, params)
    assert out.shape == (batch, in_features)
    # bf16 matmul operands -> ~1e-2-level divergence vs the pure-f32 reference.
    assert jnp.allclose(out, ref, atol=5e-2, rtol=5e-2), "mismatch vs reference"

    print("KERNEL_OK")
</pallas_src>

<mosaic_0001>
module attributes {stable_mosaic.version = 11 : i64} {
  func.func @residual_block_kernel(%arg0: i32, %arg1: memref<8x128xf32, #tpu.memory_space<vmem>>, %arg2: memref<128x128xbf16, #tpu.memory_space<vmem>>, %arg3: memref<1x128xf32, #tpu.memory_space<vmem>>, %arg4: memref<1x128xf32, #tpu.memory_space<vmem>>, %arg5: memref<1x128xf32, #tpu.memory_space<vmem>>, %arg6: memref<128x128xbf16, #tpu.memory_space<vmem>>, %arg7: memref<1x128xf32, #tpu.memory_space<vmem>>, %arg8: memref<1x128xf32, #tpu.memory_space<vmem>>, %arg9: memref<1x128xf32, #tpu.memory_space<vmem>>, %arg10: memref<8x128xf32, #tpu.memory_space<vmem>>) attributes {dimension_semantics = [#tpu.dimension_semantics<parallel>], iteration_bounds = array<i64: 1>, scalar_prefetch = 0 : i64, scratch_operands = 0 : i64, tpu.core_type = #tpu.core_type<tc>, window_params = [{transform_indices = @transform_0, window_bounds = array<i64: 8, 128>}, {pipeline_mode = #tpu.pipeline_mode<synchronous>, transform_indices = @transform_1, window_bounds = array<i64: 128, 128>}, {pipeline_mode = #tpu.pipeline_mode<synchronous>, transform_indices = @transform_2, window_bounds = array<i64: 1, 128>}, {pipeline_mode = #tpu.pipeline_mode<synchronous>, transform_indices = @transform_3, window_bounds = array<i64: 1, 128>}, {pipeline_mode = #tpu.pipeline_mode<synchronous>, transform_indices = @transform_4, window_bounds = array<i64: 1, 128>}, {pipeline_mode = #tpu.pipeline_mode<synchronous>, transform_indices = @transform_5, window_bounds = array<i64: 128, 128>}, {pipeline_mode = #tpu.pipeline_mode<synchronous>, transform_indices = @transform_6, window_bounds = array<i64: 1, 128>}, {pipeline_mode = #tpu.pipeline_mode<synchronous>, transform_indices = @transform_7, window_bounds = array<i64: 1, 128>}, {pipeline_mode = #tpu.pipeline_mode<synchronous>, transform_indices = @transform_8, window_bounds = array<i64: 1, 128>}, {transform_indices = @transform_9, window_bounds = array<i64: 8, 128>}]} {
    %c0 = arith.constant 0 : index
    %c0_0 = arith.constant 0 : index
    %0 = vector.load %arg1[%c0, %c0_0] : memref<8x128xf32, #tpu.memory_space<vmem>>, vector<8x128xf32>
    %1 = arith.truncf %0 : vector<8x128xf32> to vector<8x128xbf16>
    %c0_1 = arith.constant 0 : index
    %c0_2 = arith.constant 0 : index
    %2 = vector.load %arg2[%c0_1, %c0_2] : memref<128x128xbf16, #tpu.memory_space<vmem>>, vector<128x128xbf16>
    %cst = arith.constant dense<0.000000e+00> : vector<8x128xf32>
    %3 = tpu.matmul %1, %2, %cst {dimension_numbers = #tpu.dot_dimension_numbers<[1], [0], [0], [1], [0, 0, 1, 1], [], []>} : vector<8x128xbf16>, vector<128x128xbf16>, vector<8x128xf32> -> vector<8x128xf32>
    %c0_3 = arith.constant 0 : index
    %c0_4 = arith.constant 0 : index
    %4 = vector.load %arg3[%c0_3, %c0_4] : memref<1x128xf32, #tpu.memory_space<vmem>>, vector<1x128xf32>
    %5 = vector.broadcast %4 : vector<1x128xf32> to vector<8x128xf32>
    %6 = arith.addf %3, %5 : vector<8x128xf32>
    %c0_5 = arith.constant 0 : index
    %c0_6 = arith.constant 0 : index
    %7 = vector.load %arg4[%c0_5, %c0_6] : memref<1x128xf32, #tpu.memory_space<vmem>>, vector<1x128xf32>
    %c0_7 = arith.constant 0 : index
    %c0_8 = arith.constant 0 : index
    %8 = vector.load %arg5[%c0_7, %c0_8] : memref<1x128xf32, #tpu.memory_space<vmem>>, vector<1x128xf32>
    %cst_9 = arith.constant dense<0.000000e+00> : vector<8xf32>
    %9 = vector.multi_reduction <add>, %6, %cst_9 [1] : vector<8x128xf32> to vector<8xf32>
    %10 = vector.shape_cast %9 : vector<8xf32> to vector<8x1xf32>
    %11 = arith.mulf %6, %6 : vector<8x128xf32>
    %cst_10 = arith.constant dense<0.000000e+00> : vector<8xf32>
    %12 = vector.multi_reduction <add>, %11, %cst_10 [1] : vector<8x128xf32> to vector<8xf32>
    %13 = vector.shape_cast %12 : vector<8xf32> to vector<8x1xf32>
    %cst_11 = arith.constant 1.562500e-02 : f32
    %14 = vector.broadcast %cst_11 : f32 to vector<8x1xf32>
    %15 = arith.mulf %10, %14 : vector<8x1xf32>
    %cst_12 = arith.constant 1.562500e-02 : f32
    %16 = vector.broadcast %cst_12 : f32 to vector<8x1xf32>
    %17 = arith.mulf %13, %16 : vector<8x1xf32>
    %18 = arith.mulf %15, %15 : vector<8x1xf32>
    %19 = arith.subf %17, %18 : vector<8x1xf32>
    %20 = vector.broadcast %15 : vector<8x1xf32> to vector<8x128xf32>
    %21 = arith.subf %6, %20 : vector<8x128xf32>
    %cst_13 = arith.constant 9.99999974E-6 : f32
    %22 = vector.broadcast %cst_13 : f32 to vector<8x1xf32>
    %23 = arith.addf %19, %22 : vector<8x1xf32>
    %24 = math.rsqrt %23 : vector<8x1xf32>
    %25 = vector.broadcast %24 : vector<8x1xf32> to vector<8x128xf32>
    %26 = arith.mulf %21, %25 : vector<8x128xf32>
    %27 = vector.broadcast %7 : vector<1x128xf32> to vector<8x128xf32>
    %28 = arith.mulf %26, %27 : vector<8x128xf32>
    %29 = vector.broadcast %8 : vector<1x128xf32> to vector<8x128xf32>
    %30 = arith.addf %28, %29 : vector<8x128xf32>
    %cst_14 = arith.constant 0.000000e+00 : f32
    %31 = vector.broadcast %cst_14 : f32 to vector<8x128xf32>
    %32 = arith.maximumf %30, %31 : vector<8x128xf32>
    %33 = arith.truncf %32 : vector<8x128xf32> to vector<8x128xbf16>
    %c0_15 = arith.constant 0 : index
    %c0_16 = arith.constant 0 : index
    %34 = vector.load %arg6[%c0_15, %c0_16] : memref<128x128xbf16, #tpu.memory_space<vmem>>, vector<128x128xbf16>
    %cst_17 = arith.constant dense<0.000000e+00> : vector<8x128xf32>
    %35 = tpu.matmul %33, %34, %cst_17 {dimension_numbers = #tpu.dot_dimension_numbers<[1], [0], [0], [1], [0, 0, 1, 1], [], []>} : vector<8x128xbf16>, vector<128x128xbf16>, vector<8x128xf32> -> vector<8x128xf32>
    %c0_18 = arith.constant 0 : index
    %c0_19 = arith.constant 0 : index
    %36 = vector.load %arg7[%c0_18, %c0_19] : memref<1x128xf32, #tpu.memory_space<vmem>>, vector<1x128xf32>
    %37 = vector.broadcast %36 : vector<1x128xf32> to vector<8x128xf32>
    %38 = arith.addf %35, %37 : vector<8x128xf32>
    %c0_20 = arith.constant 0 : index
    %c0_21 = arith.constant 0 : index
    %39 = vector.load %arg8[%c0_20, %c0_21] : memref<1x128xf32, #tpu.memory_space<vmem>>, vector<1x128xf32>
    %c0_22 = arith.constant 0 : index
    %c0_23 = arith.constant 0 : index
    %40 = vector.load %arg9[%c0_22, %c0_23] : memref<1x128xf32, #tpu.memory_space<vmem>>, vector<1x128xf32>
    %cst_24 = arith.constant dense<0.000000e+00> : vector<8xf32>
    %41 = vector.multi_reduction <add>, %38, %cst_24 [1] : vector<8x128xf32> to vector<8xf32>
    %42 = vector.shape_cast %41 : vector<8xf32> to vector<8x1xf32>
    %43 = arith.mulf %38, %38 : vector<8x128xf32>
    %cst_25 = arith.constant dense<0.000000e+00> : vector<8xf32>
    %44 = vector.multi_reduction <add>, %43, %cst_25 [1] : vector<8x128xf32> to vector<8xf32>
    %45 = vector.shape_cast %44 : vector<8xf32> to vector<8x1xf32>
    %cst_26 = arith.constant 3.125000e-02 : f32
    %46 = vector.broadcast %cst_26 : f32 to vector<8x1xf32>
    %47 = arith.mulf %42, %46 : vector<8x1xf32>
    %cst_27 = arith.constant 3.125000e-02 : f32
    %48 = vector.broadcast %cst_27 : f32 to vector<8x1xf32>
    %49 = arith.mulf %45, %48 : vector<8x1xf32>
    %50 = arith.mulf %47, %47 : vector<8x1xf32>
    %51 = arith.subf %49, %50 : vector<8x1xf32>
    %52 = vector.broadcast %47 : vector<8x1xf32> to vector<8x128xf32>
    %53 = arith.subf %38, %52 : vector<8x128xf32>
    %cst_28 = arith.constant 9.99999974E-6 : f32
    %54 = vector.broadcast %cst_28 : f32 to vector<8x1xf32>
    %55 = arith.addf %51, %54 : vector<8x1xf32>
    %56 = math.rsqrt %55 : vector<8x1xf32>
    %57 = vector.broadcast %56 : vector<8x1xf32> to vector<8x128xf32>
    %58 = arith.mulf %53, %57 : vector<8x128xf32>
    %59 = vector.broadcast %39 : vector<1x128xf32> to vector<8x128xf32>
    %60 = arith.mulf %58, %59 : vector<8x128xf32>
    %61 = vector.broadcast %40 : vector<1x128xf32> to vector<8x128xf32>
    %62 = arith.addf %60, %61 : vector<8x128xf32>
    %63 = arith.addf %62, %0 : vector<8x128xf32>
    %cst_29 = arith.constant 0.000000e+00 : f32
    %64 = vector.broadcast %cst_29 : f32 to vector<8x128xf32>
    %65 = arith.maximumf %63, %64 : vector<8x128xf32>
    %c0_30 = arith.constant 0 : index
    %c0_31 = arith.constant 0 : index
    %66 = vector.load %arg10[%c0_30, %c0_31] : memref<8x128xf32, #tpu.memory_space<vmem>>, vector<8x128xf32>
    tpu.vector_store %arg10[%c0_30, %c0_31], %65 {strides = array<i32>} : memref<8x128xf32, #tpu.memory_space<vmem>>, vector<8x128xf32>,
    return
  }
  func.func @transform_0(%arg0: i32) -> (i32, i32) {
    %c0_i32 = arith.constant 0 : i32
    %c0_i32_0 = arith.constant 0 : i32
    return %arg0, %c0_i32 : i32, i32
  }
  func.func @transform_1(%arg0: i32) -> (i32, i32) {
    %c0_i32 = arith.constant 0 : i32
    %c0_i32_0 = arith.constant 0 : i32
    %c0_i32_1 = arith.constant 0 : i32
    return %c0_i32, %c0_i32_0 : i32, i32
  }
  func.func @transform_2(%arg0: i32) -> (i32, i32) {
    %c0_i32 = arith.constant 0 : i32
    %c0_i32_0 = arith.constant 0 : i32
    %c0_i32_1 = arith.constant 0 : i32
    return %c0_i32, %c0_i32_0 : i32, i32
  }
  func.func @transform_3(%arg0: i32) -> (i32, i32) {
    %c0_i32 = arith.constant 0 : i32
    %c0_i32_0 = arith.constant 0 : i32
    %c0_i32_1 = arith.constant 0 : i32
    return %c0_i32, %c0_i32_0 : i32, i32
  }
  func.func @transform_4(%arg0: i32) -> (i32, i32) {
    %c0_i32 = arith.constant 0 : i32
    %c0_i32_0 = arith.constant 0 : i32
    %c0_i32_1 = arith.constant 0 : i32
    return %c0_i32, %c0_i32_0 : i32, i32
  }
  func.func @transform_5(%arg0: i32) -> (i32, i32) {
    %c0_i32 = arith.constant 0 : i32
    %c0_i32_0 = arith.constant 0 : i32
    %c0_i32_1 = arith.constant 0 : i32
    return %c0_i32, %c0_i32_0 : i32, i32
  }
  func.func @transform_6(%arg0: i32) -> (i32, i32) {
    %c0_i32 = arith.constant 0 : i32
    %c0_i32_0 = arith.constant 0 : i32
    %c0_i32_1 = arith.constant 0 : i32
    return %c0_i32, %c0_i32_0 : i32, i32
  }
  func.func @transform_7(%arg0: i32) -> (i32, i32) {
    %c0_i32 = arith.constant 0 : i32
    %c0_i32_0 = arith.constant 0 : i32
    %c0_i32_1 = arith.constant 0 : i32
    return %c0_i32, %c0_i32_0 : i32, i32
  }
  func.func @transform_8(%arg0: i32) -> (i32, i32) {
    %c0_i32 = arith.constant 0 : i32
    %c0_i32_0 = arith.constant 0 : i32
    %c0_i32_1 = arith.constant 0 : i32
    return %c0_i32, %c0_i32_0 : i32, i32
  }
  func.func @transform_9(%arg0: i32) -> (i32, i32) {
    %c0_i32 = arith.constant 0 : i32
    %c0_i32_0 = arith.constant 0 : i32
    return %arg0, %c0_i32 : i32, i32
  }
}

</mosaic_0001>

<llo_original>
// kernel: tpu_custom_call.1
$region0: #{tpu_custom_call.1}
  #allocation0 [shape = 'u32[]', space=smem, size = 0x4, offset = 0x4, fixed_abs, tag = 'smem constant byte address 0x4 - core index']
  #allocation1 [shape = 'u32[144,128]{1,0:T(1,128)}', space=vmem, size = 0x12000, scoped, tag = 'internal scratch']
  %s0 = inlined_call_operand.hbm [shape: f32[8,128], index: 0, kind: input, shape index: {}]
  %s1 = inlined_call_operand.hbm [shape: bf16[128,128], index: 1, kind: input, shape index: {}]
  %s2 = inlined_call_operand.vmem [shape: f32[1,128], index: 2, kind: input, shape index: {}]
  %s3 = inlined_call_operand.vmem [shape: f32[1,128], index: 3, kind: input, shape index: {}]
  %s4 = inlined_call_operand.vmem [shape: f32[1,128], index: 4, kind: input, shape index: {}]
  %s5 = inlined_call_operand.hbm [shape: bf16[128,128], index: 5, kind: input, shape index: {}]
  %s6 = inlined_call_operand.vmem [shape: f32[1,128], index: 6, kind: input, shape index: {}]
  %s7 = inlined_call_operand.vmem [shape: f32[1,128], index: 7, kind: input, shape index: {}]
  %s8 = inlined_call_operand.vmem [shape: f32[1,128], index: 8, kind: input, shape index: {}]
  %s9 = inlined_call_operand.hbm [shape: f32[8,128], index: 9, kind: output, shape index: {}]
  %s10 = sld [smem:[#allocation0]]
  $region58: #{tpu_custom_call.1} parent=0
    _
  %s12 = ssub.s32 1, %s10
  %s13 = scalar_select 0, %s12, %s10
  $region1: #{tpu_custom_call.1} parent=0
    #allocation2 [shape = 'u8[4096]{0}', space=vmem, size = 0x1000, scoped, tag = 'input window, operand 0, single buffered']
    #allocation3 [shape = 's32[1]{0}', space=sflag, size = 0x4, scoped, tag = 'scoped memory for tpu_custom_call.1']
    #allocation4 [shape = 's32[1]{0}', space=sflag, size = 0x4, scoped, tag = 'scoped memory for tpu_custom_call.1']
    #allocation5 [shape = 'u8[32768]{0}', space=vmem, size = 0x8000, scoped, tag = 'input window, operand 1, single buffered']
    #allocation6 [shape = 's32[1]{0}', space=sflag, size = 0x4, scoped, tag = 'scoped memory for tpu_custom_call.1']
    #allocation7 [shape = 'u8[32768]{0}', space=vmem, size = 0x8000, scoped, tag = 'input window, operand 5, single buffered']
    #allocation8 [shape = 'u8[4096]{0}', space=vmem, size = 0x1000, scoped, tag = 'output window, operand 0, single buffered']
    %14 = vsyncpa [#allocation3], 0
    %15 = vsyncpa [#allocation6], 0
    %16 = vsyncpa [#allocation4], 0
    // Predicated region
    $region2: #{tpu_custom_call.1} parent=1 // pred_check
      _
    $region3: #{tpu_custom_call.1} parent=1 // pred_check_branch
      %18 = sbr.rel (0) target = $region5
    $region4: #{tpu_custom_call.1} parent=1 // pred_region
      %s20 = ssub.s32 128, 128
      %21 = vsyncadd [#allocation3], %s20
      %s23 = sshll.u32 [#allocation2], 4
      %s24 = int_to_ptr.vmem [resolvable:$true] %s23
      %26 = dma.hbm_to_vmem [thread:$0]  %s0, 128, %s24, [#allocation3]
    $region5: #{tpu_custom_call.1} parent=1 // pred_fallthru
      _
    // Predicated region
    $region6: #{tpu_custom_call.1} parent=1 // pred_check
      _
    $region7: #{tpu_custom_call.1} parent=1 // pred_check_branch
      %28 = sbr.rel (0) target = $region9
    $region8: #{tpu_custom_call.1} parent=1 // pred_region
      %s30 = ssub.s32 1024, 1024
      %31 = vsyncadd [#allocation6], %s30
      %s32 = sshll.u32 [#allocation5], 4
      %s33 = int_to_ptr.vmem [resolvable:$true] %s32
      %38 = dma.hbm_to_vmem [thread:$0]  %s1, 1024, %s33, [#allocation6], 64, 64, 4
    $region9: #{tpu_custom_call.1} parent=1 // pred_fallthru
      _
    // Predicated region
    $region10: #{tpu_custom_call.1} parent=1 // pred_check
      _
    $region11: #{tpu_custom_call.1} parent=1 // pred_check_branch
      %40 = sbr.rel (0) target = $region13
    $region12: #{tpu_custom_call.1} parent=1 // pred_region
      _
    $region13: #{tpu_custom_call.1} parent=1 // pred_fallthru
      _
    // Predicated region
    $region14: #{tpu_custom_call.1} parent=1 // pred_check
      _
    $region15: #{tpu_custom_call.1} parent=1 // pred_check_branch
      %42 = sbr.rel (0) target = $region17
    $region16: #{tpu_custom_call.1} parent=1 // pred_region
      _
    $region17: #{tpu_custom_call.1} parent=1 // pred_fallthru
      _
    // Predicated region
    $region18: #{tpu_custom_call.1} parent=1 // pred_check
      _
    $region19: #{tpu_custom_call.1} parent=1 // pred_check_branch
      %44 = sbr.rel (0) target = $region21
    $region20: #{tpu_custom_call.1} parent=1 // pred_region
      _
    $region21: #{tpu_custom_call.1} parent=1 // pred_fallthru
      _
    // Predicated region
    $region22: #{tpu_custom_call.1} parent=1 // pred_check
      _
    $region23: #{tpu_custom_call.1} parent=1 // pred_check_branch
      %46 = sbr.rel (0) target = $region25
    $region24: #{tpu_custom_call.1} parent=1 // pred_region
      %s48 = ssub.s32 1024, 1024
      %49 = vsyncadd [#allocation6], %s48
      %s50 = sshll.u32 [#allocation7], 4
      %s51 = int_to_ptr.vmem [resolvable:$true] %s50
      %56 = dma.hbm_to_vmem [thread:$0]  %s5, 1024, %s51, [#allocation6], 64, 64, 4
    $region25: #{tpu_custom_call.1} parent=1 // pred_fallthru
      _
    // Predicated region
    $region26: #{tpu_custom_call.1} parent=1 // pred_check
      _
    $region27: #{tpu_custom_call.1} parent=1 // pred_check_branch
      %58 = sbr.rel (0) target = $region29
    $region28: #{tpu_custom_call.1} parent=1 // pred_region
      _
    $region29: #{tpu_custom_call.1} parent=1 // pred_fallthru
      _
    // Predicated region
    $region30: #{tpu_custom_call.1} parent=1 // pred_check
      _
    $region31: #{tpu_custom_call.1} parent=1 // pred_check_branch
      %60 = sbr.rel (0) target = $region33
    $region32: #{tpu_custom_call.1} parent=1 // pred_region
      _
    $region33: #{tpu_custom_call.1} parent=1 // pred_fallthru
      _
    // Predicated region
    $region34: #{tpu_custom_call.1} parent=1 // pred_check
      _
    $region35: #{tpu_custom_call.1} parent=1 // pred_check_branch
      %62 = sbr.rel (0) target = $region37
    $region36: #{tpu_custom_call.1} parent=1 // pred_region
      _
    $region37: #{tpu_custom_call.1} parent=1 // pred_fallthru
      _
    // Predicated region
    $region38: #{tpu_custom_call.1} parent=1 // pred_check
      _
    $region39: #{tpu_custom_call.1} parent=1 // pred_check_branch
      %64 = sbr.rel (0) target = $region41
    $region40: #{tpu_custom_call.1} parent=1 // pred_region
      %65 = dma.done [#allocation3], 128
    $region41: #{tpu_custom_call.1} parent=1 // pred_fallthru
      _
    // Predicated region
    $region42: #{tpu_custom_call.1} parent=1 // pred_check
      _
    $region43: #{tpu_custom_call.1} parent=1 // pred_check_branch
      %67 = sbr.rel (0) target = $region45
    $region44: #{tpu_custom_call.1} parent=1 // pred_region
      %68 = dma.done [#allocation6], 1024
    $region45: #{tpu_custom_call.1} parent=1 // pred_fallthru
      _
    // Predicated region
    $region46: #{tpu_custom_call.1} parent=1 // pred_check
      _
    $region47: #{tpu_custom_call.1} parent=1 // pred_check_branch
      %70 = sbr.rel (0) target = $region49
    $region48: #{tpu_custom_call.1} parent=1 // pred_region
      %71 = dma.done [#allocation6], 1024
    $region49: #{tpu_custom_call.1} parent=1 // pred_fallthru
      _
    %v73 = vld [vmem:[#allocation2] sm:$0xff]
    %v74 = vpack.c.bf16 %v73, %v73
    %v75 = vld [vmem:[#allocation5] sm:$0xf]
    %v76 = vld [vmem:[#allocation5 + $0x4] sm:$0xf]
    %v77 = vld [vmem:[#allocation5 + $0x8] sm:$0xf]
    %v78 = vld [vmem:[#allocation5 + $0xc] sm:$0xf]
    %v79 = vld [vmem:[#allocation5 + $0x10] sm:$0xf]
    %v80 = vld [vmem:[#allocation5 + $0x14] sm:$0xf]
    %v81 = vld [vmem:[#allocation5 + $0x18] sm:$0xf]
    %v82 = vld [vmem:[#allocation5 + $0x1c] sm:$0xf]
    %v83 = vld [vmem:[#allocation5 + $0x20] sm:$0xf]
    %v84 = vld [vmem:[#allocation5 + $0x24] sm:$0xf]
    %v85 = vld [vmem:[#allocation5 + $0x28] sm:$0xf]
    %v86 = vld [vmem:[#allocation5 + $0x2c] sm:$0xf]
    %v87 = vld [vmem:[#allocation5 + $0x30] sm:$0xf]
    %v88 = vld [vmem:[#allocation5 + $0x34] sm:$0xf]
    %v89 = vld [vmem:[#allocation5 + $0x38] sm:$0xf]
    %v90 = vld [vmem:[#allocation5 + $0x3c] sm:$0xf]
    %v91 = vld [vmem:[%s2] sm:$0x1]
    %v93 = vlaneseq
    %v94 = vshrl.u32 %v93, 7
    %v95 = vsub.s32 0, %v94
    %v96 = vrot.slane %v91, %v95
    %v114 = vunpack.c.l.b16 %v75
    %v115 = vunpack.c.l.b16 %v76
    %v116 = vunpack.c.l.b16 %v77
    %v117 = vunpack.c.l.b16 %v78
    %v118 = vunpack.c.l.b16 %v79
    %v119 = vunpack.c.l.b16 %v80
    %v120 = vunpack.c.l.b16 %v81
    %v121 = vunpack.c.l.b16 %v82
    %v122 = vunpack.c.l.b16 %v83
    %v123 = vunpack.c.l.b16 %v84
    %v124 = vunpack.c.l.b16 %v85
    %v125 = vunpack.c.l.b16 %v86
    %v126 = vunpack.c.l.b16 %v87
    %v127 = vunpack.c.l.b16 %v88
    %v128 = vunpack.c.l.b16 %v89
    %v129 = vunpack.c.l.b16 %v90
    %v130 = vpack.c.b16 %v115, %v114
    %v131 = vpack.c.b16 %v117, %v116
    %v132 = vpack.c.b16 %v119, %v118
    %v133 = vpack.c.b16 %v121, %v120
    %v134 = vpack.c.b16 %v123, %v122
    %v135 = vpack.c.b16 %v125, %v124
    %v136 = vpack.c.b16 %v127, %v126
    %v137 = vpack.c.b16 %v129, %v128
    %146 = vmatprep.subr.bf16.mxu0 0
    %147 = vmatpush1.bf16.msra.mxu0 %v130
    %148 = vmatprep.subr.bf16.mxu0 0
    %149 = vmatpush1.bf16.msra.mxu0 %v131
    %150 = vmatprep.subr.bf16.mxu0 0
    %151 = vmatpush1.bf16.msra.mxu0 %v132
    %152 = vmatprep.subr.bf16.mxu0 0
    %153 = vmatpush1.bf16.msra.mxu0 %v133
    %154 = vmatprep.subr.bf16.mxu0 0
    %155 = vmatpush1.bf16.msra.mxu0 %v134
    %156 = vmatprep.subr.bf16.mxu0 0
    %157 = vmatpush1.bf16.msra.mxu0 %v135
    %158 = vmatprep.subr.bf16.mxu0 0
    %159 = vmatpush1.bf16.msra.mxu0 %v136
    %160 = vmatprep.subr.bf16.mxu0 0
    %161 = vmatpush1.bf16.msra.mxu0 %v137
    %162 = vmatprep.subr.bf16.mxu0 0
    %163 = vmatpush1.bf16.msra.mxu0 0
    %164 = vmatprep.subr.bf16.mxu0 0
    %165 = vmatpush1.bf16.msra.mxu0 0
    %166 = vmatprep.subr.bf16.mxu0 0
    %167 = vmatpush1.bf16.msra.mxu0 0
    %168 = vmatprep.subr.bf16.mxu0 0
    %169 = vmatpush1.bf16.msra.mxu0 0
    %170 = vmatprep.subr.bf16.mxu0 0
    %171 = vmatpush1.bf16.msra.mxu0 0
    %172 = vmatprep.subr.bf16.mxu0 0
    %173 = vmatpush1.bf16.msra.mxu0 0
    %174 = vmatprep.subr.bf16.mxu0 0
    %175 = vmatpush1.bf16.msra.mxu0 0
    %176 = vmatprep.subr.bf16.mxu0 0
    %177 = vmatpush1.bf16.msra.mxu0 0
    %178 = vmatprep.mubr.bf16.mxu0 0
    %179 = vmatmul.mubr.bf16.gmra.mrb[0].mxu0 %v74
    %v180 = vpop.f32.mrb[0].mxu0
    %v181 = vadd.f32 %v96, %v180
    %v182 = vpop.f32.mrb[0].mxu0
    %v183 = vpop.f32.mrb[0].mxu0
    %v184 = vpop.f32.mrb[0].mxu0
    %185 = vdwg.mxu0
    %v186 = vld [vmem:[%s3] sm:$0x1]
    %v187 = vld [vmem:[%s4] sm:$0x1]
    %188 = vadd.xlane.f32.xlu0 %v181
    %v189 = vpop.xlane.xlu0 %188
    %v190 = vmul.f32 %v181, %v181
    %191 = vadd.xlane.f32.xlu0 %v190
    %v192 = vpop.xlane.xlu0 %191
    %v193 = vmul.f32 %v189, 0.015625
    %v194 = vmul.f32 %v192, 0.015625
    %v195 = vmul.f32 %v193, %v193
    %v196 = vsub.f32 %v194, %v195
    %v197 = vsub.f32 %v181, %v193
    %v198 = vadd.f32 %v196, 1e-05
    %v199 = vrsqrt.pop %v198
    %v200 = vmul.f32 %v197, %v199
    %v202 = vlaneseq
    %v203 = vshrl.u32 %v202, 7
    %v204 = vsub.s32 0, %v203
    %v205 = vrot.slane %v186, %v204
    %v207 = vmul.f32 %v200, %v205
    %v209 = vlaneseq
    %v210 = vshrl.u32 %v209, 7
    %v211 = vsub.s32 0, %v210
    %v212 = vrot.slane %v187, %v211
    %v214 = vadd.f32 %v207, %v212
    %v215 = vmax.f32 %v214, 0.0
    %v216 = vpack.c.bf16 %v215, %v215
    %v217 = vld [vmem:[#allocation7] sm:$0xf]
    %v218 = vld [vmem:[#allocation7 + $0x4] sm:$0xf]
    %v219 = vld [vmem:[#allocation7 + $0x8] sm:$0xf]
    %v220 = vld [vmem:[#allocation7 + $0xc] sm:$0xf]
    %v221 = vld [vmem:[#allocation7 + $0x10] sm:$0xf]
    %v222 = vld [vmem:[#allocation7 + $0x14] sm:$0xf]
    %v223 = vld [vmem:[#allocation7 + $0x18] sm:$0xf]
    %v224 = vld [vmem:[#allocation7 + $0x1c] sm:$0xf]
    %v225 = vld [vmem:[#allocation7 + $0x20] sm:$0xf]
    %v226 = vld [vmem:[#allocation7 + $0x24] sm:$0xf]
    %v227 = vld [vmem:[#allocation7 + $0x28] sm:$0xf]
    %v228 = vld [vmem:[#allocation7 + $0x2c] sm:$0xf]
    %v229 = vld [vmem:[#allocation7 + $0x30] sm:$0xf]
    %v230 = vld [vmem:[#allocation7 + $0x34] sm:$0xf]
    %v231 = vld [vmem:[#allocation7 + $0x38] sm:$0xf]
    %v232 = vld [vmem:[#allocation7 + $0x3c] sm:$0xf]
    %v233 = vld [vmem:[%s6] sm:$0x1]
    %v235 = vlaneseq
    %v236 = vshrl.u32 %v235, 7
    %v237 = vsub.s32 0, %v236
    %v238 = vrot.slane %v233, %v237
    %v256 = vunpack.c.l.b16 %v217
    %v257 = vunpack.c.l.b16 %v218
    %v258 = vunpack.c.l.b16 %v219
    %v259 = vunpack.c.l.b16 %v220
    %v260 = vunpack.c.l.b16 %v221
    %v261 = vunpack.c.l.b16 %v222
    %v262 = vunpack.c.l.b16 %v223
    %v263 = vunpack.c.l.b16 %v224
    %v264 = vunpack.c.l.b16 %v225
    %v265 = vunpack.c.l.b16 %v226
    %v266 = vunpack.c.l.b16 %v227
    %v267 = vunpack.c.l.b16 %v228
    %v268 = vunpack.c.l.b16 %v229
    %v269 = vunpack.c.l.b16 %v230
    %v270 = vunpack.c.l.b16 %v231
    %v271 = vunpack.c.l.b16 %v232
    %v272 = vpack.c.b16 %v257, %v256
    %v273 = vpack.c.b16 %v259, %v258
    %v274 = vpack.c.b16 %v261, %v260
    %v275 = vpack.c.b16 %v263, %v262
    %v276 = vpack.c.b16 %v265, %v264
    %v277 = vpack.c.b16 %v267, %v266
    %v278 = vpack.c.b16 %v269, %v268
    %v279 = vpack.c.b16 %v271, %v270
    %288 = vmatprep.subr.bf16.mxu0 0
    %289 = vmatpush1.bf16.msra.mxu0 %v272
    %290 = vmatprep.subr.bf16.mxu0 0
    %291 = vmatpush1.bf16.msra.mxu0 %v273
    %292 = vmatprep.subr.bf16.mxu0 0
    %293 = vmatpush1.bf16.msra.mxu0 %v274
    %294 = vmatprep.subr.bf16.mxu0 0
    %295 = vmatpush1.bf16.msra.mxu0 %v275
    %296 = vmatprep.subr.bf16.mxu0 0
    %297 = vmatpush1.bf16.msra.mxu0 %v276
    %298 = vmatprep.subr.bf16.mxu0 0
    %299 = vmatpush1.bf16.msra.mxu0 %v277
    %300 = vmatprep.subr.bf16.mxu0 0
    %301 = vmatpush1.bf16.msra.mxu0 %v278
    %302 = vmatprep.subr.bf16.mxu0 0
    %303 = vmatpush1.bf16.msra.mxu0 %v279
    %304 = vmatprep.subr.bf16.mxu0 0
    %305 = vmatpush1.bf16.msra.mxu0 0
    %306 = vmatprep.subr.bf16.mxu0 0
    %307 = vmatpush1.bf16.msra.mxu0 0
    %308 = vmatprep.subr.bf16.mxu0 0
    %309 = vmatpush1.bf16.msra.mxu0 0
    %310 = vmatprep.subr.bf16.mxu0 0
    %311 = vmatpush1.bf16.msra.mxu0 0
    %312 = vmatprep.subr.bf16.mxu0 0
    %313 = vmatpush1.bf16.msra.mxu0 0
    %314 = vmatprep.subr.bf16.mxu0 0
    %315 = vmatpush1.bf16.msra.mxu0 0
    %316 = vmatprep.subr.bf16.mxu0 0
    %317 = vmatpush1.bf16.msra.mxu0 0
    %318 = vmatprep.subr.bf16.mxu0 0
    %319 = vmatpush1.bf16.msra.mxu0 0
    %320 = vmatprep.mubr.bf16.mxu0 0
    %321 = vmatmul.mubr.bf16.gmra.mrb[0].mxu0 %v216
    %v322 = vpop.f32.mrb[0].mxu0
    %v323 = vadd.f32 %v238, %v322
    %v324 = vpop.f32.mrb[0].mxu0
    %v325 = vpop.f32.mrb[0].mxu0
    %v326 = vpop.f32.mrb[0].mxu0
    %327 = vdwg.mxu0
    %v328 = vld [vmem:[%s7] sm:$0x1]
    %v329 = vld [vmem:[%s8] sm:$0x1]
    %330 = vadd.xlane.f32.xlu0 %v323
    %v331 = vpop.xlane.xlu0 %330
    %v332 = vmul.f32 %v323, %v323
    %333 = vadd.xlane.f32.xlu0 %v332
    %v334 = vpop.xlane.xlu0 %333
    %v335 = vmul.f32 %v331, 0.03125
    %v336 = vmul.f32 %v334, 0.03125
    %v337 = vmul.f32 %v335, %v335
    %v338 = vsub.f32 %v336, %v337
    %v339 = vsub.f32 %v323, %v335
    %v340 = vadd.f32 %v338, 1e-05
    %v341 = vrsqrt.pop %v340
    %v342 = vmul.f32 %v339, %v341
    %v344 = vlaneseq
    %v345 = vshrl.u32 %v344, 7
    %v346 = vsub.s32 0, %v345
    %v347 = vrot.slane %v328, %v346
    %v349 = vmul.f32 %v342, %v347
    %v351 = vlaneseq
    %v352 = vshrl.u32 %v351, 7
    %v353 = vsub.s32 0, %v352
    %v354 = vrot.slane %v329, %v353
    %v356 = vadd.f32 %v349, %v354
    %v357 = vadd.f32 %v356, %v73
    %v358 = vmax.f32 %v357, 0.0
    %359 = vst [vmem:[#allocation8] sm:$0xff] %v358
    // Predicated region
    $region50: #{tpu_custom_call.1} parent=1 // pred_check
      _
    $region51: #{tpu_custom_call.1} parent=1 // pred_check_branch
      %361 = sbr.rel (0) target = $region53
    $region52: #{tpu_custom_call.1} parent=1 // pred_region
      %s363 = ssub.s32 128, 128
      %364 = vsyncadd [#allocation4], %s363
      %s366 = sshll.u32 [#allocation8], 4
      %s367 = int_to_ptr.vmem [resolvable:$true] %s366
      %369 = dma.vmem_to_hbm [thread:$0]  %s367, 128, %s9, [#allocation4]
    $region53: #{tpu_custom_call.1} parent=1 // pred_fallthru
      _
    // Predicated region
    $region54: #{tpu_custom_call.1} parent=1 // pred_check
      _
    $region55: #{tpu_custom_call.1} parent=1 // pred_check_branch
      %371 = sbr.rel (0) target = $region57
    $region56: #{tpu_custom_call.1} parent=1 // pred_region
      %372 = dma.done [#allocation4], 128
    $region57: #{tpu_custom_call.1} parent=1 // pred_fallthru
      _
    %373 = vsyncpa [#allocation3], 1
    %374 = vsyncpa [#allocation6], 1
    %375 = vsyncpa [#allocation4], 1

</llo_original>
